<compile_context>
chip_gen: v5e
topology: v5e:2x2
jax: 0.10.0
libtpu: 0.0.40
codegen_flags: <defaults>
</compile_context>

<pallas_src>
import functools

import jax
import jax.numpy as jnp
from jax import lax
from jax.experimental import pallas as pl
from jax.experimental.pallas import tpu as pltpu

_MAX_TILE = 512      # rows gathered per grid step
_V_CHUNK = 512       # contraction-chunk for the resident one-hot matmul
_INFLIGHT = 32       # outstanding row DMAs in the HBM-gather path (power of 2)


def _round_up(x, m):
    return (x + m - 1) // m * m


@functools.lru_cache(maxsize=1)
def _tpu_memory_budget():
    """Generation-aware (vmem_limit_bytes, resident-table byte cap)."""
    vmem = 64 * 1024 * 1024                       # conservative fallback (v7x per-TC)
    try:
        vmem = int(pltpu.get_tpu_info().vmem_capacity_bytes)
    except Exception:
        pass
    vmem_limit = int(vmem * 0.8)                  # leave headroom for Mosaic scratch
    resident_cap = vmem // 4                      # single-buffered table budget
    try:
        kind = jax.devices()[0].device_kind.lower()
        if ("v5 lite" in kind) or ("v5e" in kind) or ("v5lite" in kind):
            # v5e: f32 MXU is multi-pass / slow -> prefer the DMA path earlier.
            # TODO(synk): optionally serve the table in bf16 on v5e for full MXU rate.
            resident_cap = min(resident_cap, 8 * 1024 * 1024)
    except Exception:
        pass
    return vmem_limit, resident_cap


# ---------------------------------------------------------------------------
# Path 1: table resident in VMEM, V-chunked one-hot @ table on the MXU.
# ---------------------------------------------------------------------------
def _onehot_gather_kernel(idx_ref, table_ref, out_ref, acc_ref, *,
                          vocab, v_chunk, n_chunks):
    # idx_ref:   VMEM int32[1, tile, 1]    node ids for this tile
    # table_ref: VMEM [v_pad, D]           whole (padded) table, single-buffered
    # out_ref:   VMEM [tile, D]            output tile
    # acc_ref:   VMEM f32[tile, D]         accumulator (used when n_chunks > 1)
    idx = jnp.clip(idx_ref[0], 0, vocab - 1)                     # (tile, 1)
    tile = idx.shape[0]
    # Hoisted out of the chunk loop (broadcast_in_dim is not CSE'd by JAX).
    iota = lax.broadcasted_iota(jnp.int32, (tile, v_chunk), 1)   # (tile, Vc)

    if n_chunks == 1:
        one_hot = (iota == idx).astype(table_ref.dtype)
        out_ref[...] = jnp.dot(
            one_hot, table_ref[...], preferred_element_type=jnp.float32
        ).astype(out_ref.dtype)
        return

    acc_ref[...] = jnp.zeros_like(acc_ref)

    def chunk_body(c, carry):
        v0 = pl.multiple_of(c * v_chunk, v_chunk)
        one_hot = (iota == (idx - v0)).astype(table_ref.dtype)   # rows in this chunk
        acc_ref[...] += jnp.dot(
            one_hot, table_ref[pl.ds(v0, v_chunk), :],
            preferred_element_type=jnp.float32)
        return carry

    lax.fori_loop(0, n_chunks, chunk_body, 0, unroll=min(n_chunks, 8))
    out_ref[...] = acc_ref[...].astype(out_ref.dtype)


def _gather_resident(flat_idx, table, tile, n_tiles, n_total, vmem_limit):
    V, D = table.shape
    v_chunk = min(_V_CHUNK, _round_up(V, 8))
    v_pad = _round_up(V, v_chunk)
    if v_pad != V:
        # Zero rows are never selected (ids are clamped to [0, V-1]).
        table = jnp.pad(table, ((0, v_pad - V), (0, 0)))
    n_chunks = v_pad // v_chunk

    idx3d = flat_idx.reshape(n_tiles, tile, 1)
    kernel = functools.partial(
        _onehot_gather_kernel, vocab=V, v_chunk=v_chunk, n_chunks=n_chunks)

    itemsize = table.dtype.itemsize
    cost = pl.CostEstimate(
        flops=2 * n_total * v_pad * D,
        transcendentals=0,
        bytes_accessed=v_pad * D * itemsize + n_total * D * itemsize + n_total * 4)

    return pl.pallas_call(
        kernel,
        out_shape=jax.ShapeDtypeStruct((n_total, D), table.dtype),
        grid=(n_tiles,),
        in_specs=[
            pl.BlockSpec((1, tile, 1), lambda i: (i, 0, 0)),
            # Constant block index -> fetched once; single-buffered so the
            # table only occupies one VMEM copy (matters on v7x's 64 MiB/TC).
            pl.BlockSpec((v_pad, D), lambda i: (0, 0),
                         pipeline_mode=pl.Buffered(buffer_count=1)),
        ],
        out_specs=pl.BlockSpec((tile, D), lambda i: (i, 0)),
        scratch_shapes=[pltpu.VMEM((tile, D), jnp.float32)],
        compiler_params=pltpu.CompilerParams(
            dimension_semantics=("parallel",),
            vmem_limit_bytes=vmem_limit,
        ),
        cost_estimate=cost,
    )(idx3d, table)


# ---------------------------------------------------------------------------
# Path 2: table stays in HBM; per-row DMAs straight into the output block.
# ---------------------------------------------------------------------------
def _hbm_dma_gather_kernel(idx_ref, table_hbm, out_ref, copy_sems, *,
                           tile, vocab, inflight, n_valid):
    # idx_ref:   SMEM int32[n_total]      scalar-prefetched node ids
    # table_hbm: HBM  [V, D]              raw ref (memory_space=pl.ANY)
    # out_ref:   VMEM [tile, D]           output tile (also the DMA landing zone)
    # copy_sems: DMA semaphores, shape (inflight,)
    base = pl.multiple_of(pl.program_id(0) * tile, tile)
    n_row = jnp.minimum(tile, n_valid - base)     # valid rows in this tile

    def start_row(r, slot):
        node = jnp.clip(idx_ref[base + r], 0, vocab - 1)
        pltpu.make_async_copy(
            table_hbm.at[pl.ds(node, 1), :],
            out_ref.at[pl.ds(r, 1), :],
            copy_sems.at[slot],
        ).start()

    def wait_row(r, slot):
        # Wait only needs a descriptor with the same byte count ((1, D) rows),
        # so use a fixed source row: no SMEM read sits behind the wait.
        pltpu.make_async_copy(
            table_hbm.at[pl.ds(0, 1), :],
            out_ref.at[pl.ds(r, 1), :],
            copy_sems.at[slot],
        ).wait()

    # Prime the pipeline with up to `inflight` outstanding row DMAs.
    for s in range(inflight):
        @pl.when(s < n_row)
        def _(s=s):
            start_row(s, s)

    def row_body(r, carry):
        slot = r % inflight
        nxt = r + inflight
        # Hoist the next row's SMEM index read above the wait (.wait() breaks
        # SMEM sst->sld forwarding).  Clamped read stays in bounds; the value
        # is only used when nxt < n_row.
        nxt_node = jnp.clip(idx_ref[base + jnp.minimum(nxt, tile - 1)], 0, vocab - 1)

        @pl.when(r < n_row)
        def _():
            wait_row(r, slot)

            @pl.when(nxt < n_row)
            def _():
                pltpu.make_async_copy(
                    table_hbm.at[pl.ds(nxt_node, 1), :],
                    out_ref.at[pl.ds(nxt, 1), :],
                    copy_sems.at[slot],
                ).start()
        return carry

    # Unrolled so the LLO scheduler can interleave starts/waits across rows.
    lax.fori_loop(0, tile, row_body, 0, unroll=4)


def _gather_hbm_dma(flat_idx, table, tile, n_tiles, n_total, n_valid, vmem_limit):
    V, D = table.shape
    inflight = min(_INFLIGHT, tile)
    kernel = functools.partial(
        _hbm_dma_gather_kernel, tile=tile, vocab=V, inflight=inflight,
        n_valid=n_valid)

    itemsize = table.dtype.itemsize
    cost = pl.CostEstimate(
        flops=0, transcendentals=0,
        bytes_accessed=n_valid * D * itemsize + n_total * D * itemsize + n_total * 4)

    # TODO(synk): for very large N (hundreds of thousands of ids) chunk the
    # scalar-prefetch index vector so its SMEM copy stays small.
    return pl.pallas_call(
        kernel,
        out_shape=jax.ShapeDtypeStruct((n_total, D), table.dtype),
        grid_spec=pltpu.PrefetchScalarGridSpec(
            num_scalar_prefetch=1,                          # flat ids -> SMEM
            grid=(n_tiles,),
            in_specs=[pl.BlockSpec(memory_space=pl.ANY)],   # table stays in HBM
            out_specs=pl.BlockSpec((tile, D), lambda i, idx: (i, 0)),
            scratch_shapes=[pltpu.SemaphoreType.DMA((inflight,))],
        ),
        compiler_params=pltpu.CompilerParams(
            dimension_semantics=("parallel",),
            vmem_limit_bytes=vmem_limit,
        ),
        cost_estimate=cost,
    )(flat_idx, table)


# ---------------------------------------------------------------------------
# Public forward (== Node2Vec.forward == nn.Embedding lookup).
# ---------------------------------------------------------------------------
def node2vec_forward(nodes, embedding_table, *, force_impl=None):
    """Returns embedding_table[nodes] with nn.Embedding forward semantics."""
    V, D = embedding_table.shape
    lead_shape = nodes.shape

    flat = nodes.reshape(-1).astype(jnp.int32)
    N = int(flat.shape[0])
    if N == 0:
        return jnp.zeros(lead_shape + (D,), embedding_table.dtype)

    # Large, sublane-aligned tile (capped by the actual number of ids).
    tile = min(_MAX_TILE, _round_up(N, 8))
    n_total = _round_up(N, tile)
    if n_total != N:
        flat = jnp.pad(flat, (0, n_total - N))   # padded rows masked / discarded
    n_tiles = n_total // tile

    vmem_limit, resident_cap = _tpu_memory_budget()
    table_bytes = V * D * embedding_table.dtype.itemsize
    impl = force_impl or ("resident" if table_bytes <= resident_cap else "dma")

    if impl == "resident":
        out = _gather_resident(flat, embedding_table, tile, n_tiles, n_total,
                               vmem_limit)
    else:
        out = _gather_hbm_dma(flat, embedding_table, tile, n_tiles, n_total,
                              N, vmem_limit)

    return out[:N].reshape(*lead_shape, D)


if __name__ == "__main__":
    key = jax.random.PRNGKey(0)

    # --- Config 1: small vocab (the module's typical use), both paths. -----
    num_nodes, embedding_dim = 64, 128
    batch, seq = 2, 8
    k_emb, k_idx, key = jax.random.split(key, 3)
    table = jax.random.normal(k_emb, (num_nodes, embedding_dim), dtype=jnp.float32)
    nodes = jax.random.randint(k_idx, (batch, seq), 0, num_nodes, dtype=jnp.int32)
    ref = table[nodes]                                   # plain-JAX gather == PyTorch

    out_res = jax.block_until_ready(node2vec_forward(nodes, table))
    assert out_res.shape == (batch, seq, embedding_dim)
    assert jnp.allclose(out_res, ref), "resident-path gather mismatch"

    out_dma = jax.block_until_ready(node2vec_forward(nodes, table, force_impl="dma"))
    assert jnp.allclose(out_dma, ref), "HBM DMA-path gather mismatch"

    # --- Config 2: non-multiple sizes -> exercises V-chunking, table padding
    #     and last-tile masking in the DMA path. -----------------------------
    num_nodes2, dim2 = 700, 128
    k_emb2, k_idx2, key = jax.random.split(key, 3)
    table2 = jax.random.normal(k_emb2, (num_nodes2, dim2), dtype=jnp.float32)
    nodes2 = jax.random.randint(k_idx2, (3, 7), 0, num_nodes2, dtype=jnp.int32)
    ref2 = table2[nodes2]

    out2_res = jax.block_until_ready(
        node2vec_forward(nodes2, table2, force_impl="resident"))
    assert jnp.allclose(out2_res, ref2), "resident-path (V-chunked) mismatch"

    out2_dma = jax.block_until_ready(
        node2vec_forward(nodes2, table2, force_impl="dma"))
    assert jnp.allclose(out2_dma, ref2), "HBM DMA-path (masked last tile) mismatch"

    print("KERNEL_OK")
</pallas_src>

<mosaic_0001>
module attributes {stable_mosaic.version = 11 : i64} {
  func.func @_onehot_gather_kernel(%arg0: i32, %arg1: memref<1x16x1xi32, #tpu.memory_space<vmem>>, %arg2: memref<64x128xf32, #tpu.memory_space<vmem>>, %arg3: memref<16x128xf32, #tpu.memory_space<vmem>>, %arg4: memref<16x128xf32, #tpu.memory_space<vmem>>) attributes {dimension_semantics = [#tpu.dimension_semantics<parallel>], iteration_bounds = array<i64: 1>, scalar_prefetch = 0 : i64, scratch_operands = 1 : i64, tpu.core_type = #tpu.core_type<tc>, window_params = [{transform_indices = @transform_0, window_bounds = array<i64: 1, 16, 1>}, {pipeline_mode = #tpu.pipeline_mode<synchronous>, transform_indices = @transform_1, window_bounds = array<i64: 64, 128>}, {transform_indices = @transform_2, window_bounds = array<i64: 16, 128>}]} {
    %c0 = arith.constant 0 : index
    %c0_0 = arith.constant 0 : index
    %c0_1 = arith.constant 0 : index
    %0 = vector.load %arg1[%c0, %c0_0, %c0_1] : memref<1x16x1xi32, #tpu.memory_space<vmem>>, vector<1x16x1xi32>
    %1 = vector.shape_cast %0 : vector<1x16x1xi32> to vector<16x1xi32>
    %c0_i32 = arith.constant 0 : i32
    %c63_i32 = arith.constant 63 : i32
    %2 = vector.broadcast %c0_i32 : i32 to vector<16x1xi32>
    %3 = arith.maxsi %2, %1 : vector<16x1xi32>
    %4 = vector.broadcast %c63_i32 : i32 to vector<16x1xi32>
    %5 = arith.minsi %4, %3 : vector<16x1xi32>
    %6 = tpu.iota {dimensions = array<i32: 1>} : vector<16x64xi32>
    %7 = vector.broadcast %5 : vector<16x1xi32> to vector<16x64xi32>
    %8 = arith.cmpi eq, %6, %7 : vector<16x64xi32>
    %9 = arith.extui %8 : vector<16x64xi1> to vector<16x64xi32>
    %10 = arith.sitofp %9 : vector<16x64xi32> to vector<16x64xf32>
    %c0_2 = arith.constant 0 : index
    %c0_3 = arith.constant 0 : index
    %11 = vector.load %arg2[%c0_2, %c0_3] : memref<64x128xf32, #tpu.memory_space<vmem>>, vector<64x128xf32>
    %cst = arith.constant dense<0.000000e+00> : vector<16x128xf32>
    %12 = tpu.matmul %10, %11, %cst {dimension_numbers = #tpu.dot_dimension_numbers<[1], [0], [0], [1], [0, 0, 1, 1], [], []>} : vector<16x64xf32>, vector<64x128xf32>, vector<16x128xf32> -> vector<16x128xf32>
    %c0_4 = arith.constant 0 : index
    %c0_5 = arith.constant 0 : index
    %13 = vector.load %arg3[%c0_4, %c0_5] : memref<16x128xf32, #tpu.memory_space<vmem>>, vector<16x128xf32>
    tpu.vector_store %arg3[%c0_4, %c0_5], %12 {strides = array<i32>} : memref<16x128xf32, #tpu.memory_space<vmem>>, vector<16x128xf32>,
    return
  }
  func.func @transform_0(%arg0: i32) -> (i32, i32, i32) {
    %c0_i32 = arith.constant 0 : i32
    %c0_i32_0 = arith.constant 0 : i32
    %c0_i32_1 = arith.constant 0 : i32
    return %arg0, %c0_i32, %c0_i32_0 : i32, i32, i32
  }
  func.func @transform_1(%arg0: i32) -> (i32, i32) {
    %c0_i32 = arith.constant 0 : i32
    %c0_i32_0 = arith.constant 0 : i32
    %c0_i32_1 = arith.constant 0 : i32
    return %c0_i32, %c0_i32_0 : i32, i32
  }
  func.func @transform_2(%arg0: i32) -> (i32, i32) {
    %c0_i32 = arith.constant 0 : i32
    %c0_i32_0 = arith.constant 0 : i32
    return %arg0, %c0_i32 : i32, i32
  }
}

</mosaic_0001>

<llo_original>
// kernel: tpu_custom_call.1
$region0: #{tpu_custom_call.1}
  #allocation0 [shape = 'u32[]', space=smem, size = 0x4, offset = 0x4, fixed_abs, tag = 'smem constant byte address 0x4 - core index']
  #allocation1 [shape = 'u32[72,128]{1,0:T(1,128)}', space=vmem, size = 0x9000, scoped, tag = 'internal scratch']
  #allocation2 [shape = 'f32[16,128]{1,0:T(8,128)}', space=vmem, size = 0x2000, scoped, tag = 'scratch operand']
  %s0 = inlined_call_operand.vmem [shape: s32[1,16,1], index: 0, kind: input, shape index: {}]
  %s1 = inlined_call_operand.hbm [shape: f32[64,128], index: 1, kind: input, shape index: {}]
  %s2 = inlined_call_operand.hbm [shape: f32[16,128], index: 2, kind: output, shape index: {}]
  %s3 = sld [smem:[#allocation0]]
  $region22: #{tpu_custom_call.1} parent=0
    _
  %s5 = ssub.s32 1, %s3
  %s6 = scalar_select 0, %s5, %s3
  $region1: #{tpu_custom_call.1} parent=0
    #allocation3 [shape = 'u8[32768]{0}', space=vmem, size = 0x8000, scoped, tag = 'input window, operand 1, single buffered']
    #allocation4 [shape = 's32[1]{0}', space=sflag, size = 0x4, scoped, tag = 'scoped memory for tpu_custom_call.1']
    #allocation5 [shape = 's32[1]{0}', space=sflag, size = 0x4, scoped, tag = 'scoped memory for tpu_custom_call.1']
    #allocation6 [shape = 'u8[8192]{0}', space=vmem, size = 0x2000, scoped, tag = 'output window, operand 0, single buffered']
    %7 = vsyncpa [#allocation4], 0
    %8 = vsyncpa [#allocation5], 0
    // Predicated region
    $region2: #{tpu_custom_call.1} parent=1 // pred_check
      _
    $region3: #{tpu_custom_call.1} parent=1 // pred_check_branch
      %10 = sbr.rel (0) target = $region5
    $region4: #{tpu_custom_call.1} parent=1 // pred_region
      _
    $region5: #{tpu_custom_call.1} parent=1 // pred_fallthru
      _
    // Predicated region
    $region6: #{tpu_custom_call.1} parent=1 // pred_check
      _
    $region7: #{tpu_custom_call.1} parent=1 // pred_check_branch
      %12 = sbr.rel (0) target = $region9
    $region8: #{tpu_custom_call.1} parent=1 // pred_region
      %14 = vsyncadd [#allocation4], 0
      %s15 = sshll.u32 %s1, 4
      %s16 = int_to_ptr.hbm [resolvable:$true] %s15
      %s17 = sshll.u32 [#allocation3], 4
      %s18 = int_to_ptr.vmem [resolvable:$true] %s17
      %23 = dma.hbm_to_vmem [thread:$0]  %s16, 1024, %s18, [#allocation4], 128, 128, 8
    $region9: #{tpu_custom_call.1} parent=1 // pred_fallthru
      _
    // Predicated region
    $region10: #{tpu_custom_call.1} parent=1 // pred_check
      _
    $region11: #{tpu_custom_call.1} parent=1 // pred_check_branch
      %25 = sbr.rel (0) target = $region13
    $region12: #{tpu_custom_call.1} parent=1 // pred_region
      %27 = dma.done [#allocation4], 1024
    $region13: #{tpu_custom_call.1} parent=1 // pred_fallthru
      _
    %v28 = vld [vmem:[%s0] sm:$0xff]
    %v29 = vld [vmem:[%s0 + $0x8] sm:$0xff]
    %vm30 = vcmp.gt.s32.totalorder %v28, 0
    %v31 = vsel %vm30, %v28, 0
    %vm32 = vcmp.gt.s32.totalorder %v29, 0
    %v33 = vsel %vm32, %v29, 0
    %vm34 = vcmp.lt.s32.totalorder %v31, 63
    %v35 = vsel %vm34, %v31, 63
    %vm36 = vcmp.lt.s32.totalorder %v33, 63
    %v37 = vsel %vm36, %v33, 63
    %v38 = vlaneseq
    %v39 = vand.u32 %v38, 127
    %40 = vset.pattern.permute.xlu0 0
    %41 = vperm.xlu0 %40, %v35
    %v42 = vpop.permute.xlu0 %41
    %43 = vset.pattern.permute.xlu0 0
    %44 = vperm.xlu0 %43, %v37
    %v45 = vpop.permute.xlu0 %44
    %vm46 = vcmp.eq.s32.totalorder %v39, %v42
    %vm47 = vcmp.eq.s32.totalorder %v39, %v45
    %v48 = vsel %vm46, 1, 0
    %v49 = vsel %vm47, 1, 0
    %v50 = vcvt.s32.f32 %v48
    %v51 = vcvt.s32.f32 %v49
    %v52 = vld [vmem:[#allocation3] sm:$0xff]
    %v53 = vld [vmem:[#allocation3 + $0x8] sm:$0xff]
    %v54 = vld [vmem:[#allocation3 + $0x10] sm:$0xff]
    %v55 = vld [vmem:[#allocation3 + $0x18] sm:$0xff]
    %v56 = vld [vmem:[#allocation3 + $0x20] sm:$0xff]
    %v57 = vld [vmem:[#allocation3 + $0x28] sm:$0xff]
    %v58 = vld [vmem:[#allocation3 + $0x30] sm:$0xff]
    %v59 = vld [vmem:[#allocation3 + $0x38] sm:$0xff]
    %vm60 = vcmask 523264
    %v62 = vsel %vm60, %v50, 0
    %v65 = vsel %vm60, %v51, 0
    %67 = vmatpush.msra.mxu0 0.0
    %68 = vmatpush.msra.mxu0 0.0
    %69 = vmatpush.msra.mxu0 0.0
    %70 = vmatpush.msra.mxu0 0.0
    %71 = vmatpush.msra.mxu0 0.0
    %72 = vmatpush.msra.mxu0 0.0
    %73 = vmatpush.msra.mxu0 0.0
    %74 = vmatpush.msra.mxu0 0.0
    %75 = vmatpush.msra.mxu0 %v59
    %76 = vmatpush.msra.mxu0 %v58
    %77 = vmatpush.msra.mxu0 %v57
    %78 = vmatpush.msra.mxu0 %v56
    %79 = vmatpush.msra.mxu0 %v55
    %80 = vmatpush.msra.mxu0 %v54
    %81 = vmatpush.msra.mxu0 %v53
    %82 = vmatpush.msra.mxu0 %v52
    %83 = vmatmul.f32.gmra.mxu0 %v62
    %v84 = vpop.f32.mrf.mxu0
    %v85 = vadd.f32 0.0, %v84
    %86 = vmatmul.f32.gmra.mxu0 %v65
    %v87 = vpop.f32.mrf.mxu0
    %v88 = vadd.f32 0.0, %v87
    %89 = vdwg.mxu0
    %90 = vst [vmem:[#allocation6] sm:$0xff] %v85
    %91 = vst [vmem:[#allocation6 + $0x8] sm:$0xff] %v88
    // Predicated region
    $region14: #{tpu_custom_call.1} parent=1 // pred_check
      _
    $region15: #{tpu_custom_call.1} parent=1 // pred_check_branch
      %93 = sbr.rel (0) target = $region17
    $region16: #{tpu_custom_call.1} parent=1 // pred_region
      %95 = vsyncadd [#allocation5], 0
      %s96 = sshll.u32 [#allocation6], 4
      %s97 = int_to_ptr.vmem [resolvable:$true] %s96
      %s98 = sshll.u32 %s2, 4
      %s99 = int_to_ptr.hbm [resolvable:$true] %s98
      %104 = dma.vmem_to_hbm [thread:$0]  %s97, 256, %s99, [#allocation5], 128, 128, 8
    $region17: #{tpu_custom_call.1} parent=1 // pred_fallthru
      _
    // Predicated region
    $region18: #{tpu_custom_call.1} parent=1 // pred_check
      _
    $region19: #{tpu_custom_call.1} parent=1 // pred_check_branch
      %106 = sbr.rel (0) target = $region21
    $region20: #{tpu_custom_call.1} parent=1 // pred_region
      %108 = dma.done [#allocation5], 256
    $region21: #{tpu_custom_call.1} parent=1 // pred_fallthru
      _
    %109 = vsyncpa [#allocation4], 1
    %110 = vsyncpa [#allocation5], 1

</llo_original>
